<compile_context>
chip_gen: v5e
topology: v5e:2x2
jax: 0.10.0
libtpu: 0.0.40
codegen_flags: <defaults>
</compile_context>

<pallas_src>
import jax
import jax.numpy as jnp
from jax.experimental import pallas as pl
from jax.experimental.pallas import tpu as pltpu


def _odefunc_kernel(yT_ref, w1_ref, b1_ref, w2_ref, b2_ref, oT_ref):
    yT = yT_ref[...]                       # (2, TB)  batch on lanes
    y3 = yT * yT * yT                      # y ** 3, VPU elementwise

    # --- Linear(2, 50): K = 2, so skip the MXU and use two VPU broadcast FMAs.
    w1 = w1_ref[...]                       # (50, 2)  PyTorch (out, in) layout
    h = (w1[:, 0:1] * y3[0:1, :]           # (50,1) * (1,TB) -> (50,TB)
         + w1[:, 1:2] * y3[1:2, :]
         + b1_ref[...])                    # (50,1) bias broadcast over lanes
    h = jnp.tanh(h)                        # EUP, f32

    # --- Linear(50, 2): lane-dense MXU matmul (M=2, K=50, N=TB).
    o = jnp.dot(w2_ref[...], h, preferred_element_type=jnp.float32)
    o = o + b2_ref[...]                    # (2,1) bias broadcast over lanes
    oT_ref[...] = o.astype(oT_ref.dtype)   # (2, TB) lane-dense store


def _round_up(x, m):
    return ((x + m - 1) // m) * m


def odefunc_forward(t, y, w1, b1, w2, b2, *, block_b=1024):
    """Pallas equivalent of ODEFunc.forward(t, y) = net(y ** 3).

    t is accepted for API parity with the PyTorch module but unused.
    Weights are stored in PyTorch layout: w1 (50, 2), w2 (2, 50);
    biases are stored 2-D: b1 (50, 1), b2 (2, 1).
    """
    del t
    B, F = y.shape
    H = w1.shape[0]
    assert F == 2 and w1.shape == (H, F) and w2.shape == (F, H)
    assert b1.shape == (H, 1) and b2.shape == (F, 1)

    # Batch tile: multiple of 128 lanes; pad batch up to a whole number of tiles.
    TB = min(block_b, _round_up(B, 128))
    Bp = _round_up(B, TB)

    # Layout plumbing: batch on lanes.
    yT = y.T                               # (2, B)
    if Bp != B:
        yT = jnp.pad(yT, ((0, 0), (0, Bp - B)))

    full = lambda shape: pl.BlockSpec(shape, lambda i: (0,) * len(shape))

    oT = pl.pallas_call(
        _odefunc_kernel,
        out_shape=jax.ShapeDtypeStruct((F, Bp), y.dtype),
        grid=(pl.cdiv(Bp, TB),),
        in_specs=[
            pl.BlockSpec((F, TB), lambda i: (0, i)),   # yT, blocked over batch
            full((H, F)),                              # w1, resident
            full((H, 1)),                              # b1, resident
            full((F, H)),                              # w2, resident
            full((F, 1)),                              # b2, resident
        ],
        out_specs=pl.BlockSpec((F, TB), lambda i: (0, i)),
        compiler_params=pltpu.CompilerParams(
            dimension_semantics=("parallel",)),
    )(yT, w1, b1, w2, b2)

    return oT[:, :B].T                     # back to (B, 2) for callers


def init_params(key):
    """Deterministic init mirroring the PyTorch module:
    weights ~ N(0, 0.1), biases = 0.  PyTorch (out, in) layout, 2-D biases."""
    k1, k2 = jax.random.split(key)
    w1 = 0.1 * jax.random.normal(k1, (50, 2), dtype=jnp.float32)
    b1 = jnp.zeros((50, 1), dtype=jnp.float32)
    w2 = 0.1 * jax.random.normal(k2, (2, 50), dtype=jnp.float32)
    b2 = jnp.zeros((2, 1), dtype=jnp.float32)
    return w1, b1, w2, b2


if __name__ == "__main__":
    key = jax.random.PRNGKey(0)
    kp, ky = jax.random.split(key)

    w1, b1, w2, b2 = init_params(kp)

    batch = 256
    y = jax.random.normal(ky, (batch, 2), dtype=jnp.float32)
    t = jnp.float32(0.0)  # unused by the forward pass

    out = jax.block_until_ready(odefunc_forward(t, y, w1, b1, w2, b2))

    # Pure-JAX reference of the same math (PyTorch layout: x @ W.T + b).
    ref = jnp.tanh((y ** 3) @ w1.T + b1[:, 0]) @ w2.T + b2[:, 0]
    assert out.shape == (batch, 2)
    assert jnp.allclose(out, ref, atol=1e-5, rtol=1e-5)

    print("KERNEL_OK")
</pallas_src>

<mosaic_0001>
module attributes {stable_mosaic.version = 11 : i64} {
  func.func @_odefunc_kernel(%arg0: i32, %arg1: memref<2x256xf32, #tpu.memory_space<vmem>>, %arg2: memref<50x2xf32, #tpu.memory_space<vmem>>, %arg3: memref<50x1xf32, #tpu.memory_space<vmem>>, %arg4: memref<2x50xf32, #tpu.memory_space<vmem>>, %arg5: memref<2x1xf32, #tpu.memory_space<vmem>>, %arg6: memref<2x256xf32, #tpu.memory_space<vmem>>) attributes {dimension_semantics = [#tpu.dimension_semantics<parallel>], iteration_bounds = array<i64: 1>, scalar_prefetch = 0 : i64, scratch_operands = 0 : i64, tpu.core_type = #tpu.core_type<tc>, window_params = [{transform_indices = @transform_0, window_bounds = array<i64: 2, 256>}, {pipeline_mode = #tpu.pipeline_mode<synchronous>, transform_indices = @transform_1, window_bounds = array<i64: 50, 2>}, {pipeline_mode = #tpu.pipeline_mode<synchronous>, transform_indices = @transform_2, window_bounds = array<i64: 50, 1>}, {pipeline_mode = #tpu.pipeline_mode<synchronous>, transform_indices = @transform_3, window_bounds = array<i64: 2, 50>}, {pipeline_mode = #tpu.pipeline_mode<synchronous>, transform_indices = @transform_4, window_bounds = array<i64: 2, 1>}, {transform_indices = @transform_5, window_bounds = array<i64: 2, 256>}]} {
    %c0 = arith.constant 0 : index
    %c0_0 = arith.constant 0 : index
    %0 = vector.load %arg1[%c0, %c0_0] : memref<2x256xf32, #tpu.memory_space<vmem>>, vector<2x256xf32>
    %1 = arith.mulf %0, %0 : vector<2x256xf32>
    %2 = arith.mulf %1, %0 : vector<2x256xf32>
    %c0_1 = arith.constant 0 : index
    %c0_2 = arith.constant 0 : index
    %3 = vector.load %arg2[%c0_1, %c0_2] : memref<50x2xf32, #tpu.memory_space<vmem>>, vector<50x2xf32>
    %4 = vector.extract_strided_slice %3 {offsets = [0, 0], sizes = [50, 1], strides = [1, 1]} : vector<50x2xf32> to vector<50x1xf32>
    %5 = vector.extract_strided_slice %2 {offsets = [0, 0], sizes = [1, 256], strides = [1, 1]} : vector<2x256xf32> to vector<1x256xf32>
    %6 = vector.broadcast %4 : vector<50x1xf32> to vector<50x256xf32>
    %7 = vector.broadcast %5 : vector<1x256xf32> to vector<50x256xf32>
    %8 = arith.mulf %6, %7 : vector<50x256xf32>
    %9 = vector.extract_strided_slice %3 {offsets = [0, 1], sizes = [50, 1], strides = [1, 1]} : vector<50x2xf32> to vector<50x1xf32>
    %10 = vector.extract_strided_slice %2 {offsets = [1, 0], sizes = [1, 256], strides = [1, 1]} : vector<2x256xf32> to vector<1x256xf32>
    %11 = vector.broadcast %9 : vector<50x1xf32> to vector<50x256xf32>
    %12 = vector.broadcast %10 : vector<1x256xf32> to vector<50x256xf32>
    %13 = arith.mulf %11, %12 : vector<50x256xf32>
    %14 = arith.addf %8, %13 : vector<50x256xf32>
    %c0_3 = arith.constant 0 : index
    %c0_4 = arith.constant 0 : index
    %15 = vector.load %arg3[%c0_3, %c0_4] : memref<50x1xf32, #tpu.memory_space<vmem>>, vector<50x1xf32>
    %16 = vector.broadcast %15 : vector<50x1xf32> to vector<50x256xf32>
    %17 = arith.addf %14, %16 : vector<50x256xf32>
    %18 = math.tanh %17 : vector<50x256xf32>
    %c0_5 = arith.constant 0 : index
    %c0_6 = arith.constant 0 : index
    %19 = vector.load %arg4[%c0_5, %c0_6] : memref<2x50xf32, #tpu.memory_space<vmem>>, vector<2x50xf32>
    %cst = arith.constant dense<0.000000e+00> : vector<2x256xf32>
    %20 = tpu.matmul %19, %18, %cst {dimension_numbers = #tpu.dot_dimension_numbers<[1], [0], [0], [1], [0, 0, 1, 1], [], []>} : vector<2x50xf32>, vector<50x256xf32>, vector<2x256xf32> -> vector<2x256xf32>
    %c0_7 = arith.constant 0 : index
    %c0_8 = arith.constant 0 : index
    %21 = vector.load %arg5[%c0_7, %c0_8] : memref<2x1xf32, #tpu.memory_space<vmem>>, vector<2x1xf32>
    %22 = vector.broadcast %21 : vector<2x1xf32> to vector<2x256xf32>
    %23 = arith.addf %20, %22 : vector<2x256xf32>
    %c0_9 = arith.constant 0 : index
    %c0_10 = arith.constant 0 : index
    %24 = vector.load %arg6[%c0_9, %c0_10] : memref<2x256xf32, #tpu.memory_space<vmem>>, vector<2x256xf32>
    tpu.vector_store %arg6[%c0_9, %c0_10], %23 {strides = array<i32>} : memref<2x256xf32, #tpu.memory_space<vmem>>, vector<2x256xf32>,
    return
  }
  func.func @transform_0(%arg0: i32) -> (i32, i32) {
    %c0_i32 = arith.constant 0 : i32
    %c0_i32_0 = arith.constant 0 : i32
    return %c0_i32, %arg0 : i32, i32
  }
  func.func @transform_1(%arg0: i32) -> (i32, i32) {
    %c0_i32 = arith.constant 0 : i32
    %c0_i32_0 = arith.constant 0 : i32
    %c0_i32_1 = arith.constant 0 : i32
    return %c0_i32, %c0_i32_0 : i32, i32
  }
  func.func @transform_2(%arg0: i32) -> (i32, i32) {
    %c0_i32 = arith.constant 0 : i32
    %c0_i32_0 = arith.constant 0 : i32
    %c0_i32_1 = arith.constant 0 : i32
    return %c0_i32, %c0_i32_0 : i32, i32
  }
  func.func @transform_3(%arg0: i32) -> (i32, i32) {
    %c0_i32 = arith.constant 0 : i32
    %c0_i32_0 = arith.constant 0 : i32
    %c0_i32_1 = arith.constant 0 : i32
    return %c0_i32, %c0_i32_0 : i32, i32
  }
  func.func @transform_4(%arg0: i32) -> (i32, i32) {
    %c0_i32 = arith.constant 0 : i32
    %c0_i32_0 = arith.constant 0 : i32
    %c0_i32_1 = arith.constant 0 : i32
    return %c0_i32, %c0_i32_0 : i32, i32
  }
  func.func @transform_5(%arg0: i32) -> (i32, i32) {
    %c0_i32 = arith.constant 0 : i32
    %c0_i32_0 = arith.constant 0 : i32
    return %c0_i32, %arg0 : i32, i32
  }
}

</mosaic_0001>

<llo_original>
// kernel: tpu_custom_call.1
$region0: #{tpu_custom_call.1}
  #allocation0 [shape = 'u32[]', space=smem, size = 0x4, offset = 0x4, fixed_abs, tag = 'smem constant byte address 0x4 - core index']
  #allocation1 [shape = 'u32[72,128]{1,0:T(1,128)}', space=vmem, size = 0x9000, scoped, tag = 'internal scratch']
  %s0 = inlined_call_operand.vmem [shape: f32[2,256], index: 0, kind: input, shape index: {}]
  %s1 = inlined_call_operand.vmem [shape: f32[50,2], index: 1, kind: input, shape index: {}]
  %s2 = inlined_call_operand.vmem [shape: f32[50,1], index: 2, kind: input, shape index: {}]
  %s3 = inlined_call_operand.vmem [shape: f32[2,50], index: 3, kind: input, shape index: {}]
  %s4 = inlined_call_operand.vmem [shape: f32[2,1], index: 4, kind: input, shape index: {}]
  %s5 = inlined_call_operand.hbm [shape: f32[2,256], index: 5, kind: output, shape index: {}]
  %s6 = sld [smem:[#allocation0]]
  $region30: #{tpu_custom_call.1} parent=0
    _
  %s8 = ssub.s32 1, %s6
  %s9 = scalar_select 0, %s8, %s6
  $region1: #{tpu_custom_call.1} parent=0
    #allocation2 [shape = 'u8[2048]{0}', space=vmem, size = 0x800, scoped, tag = 'output window, operand 0, single buffered']
    #allocation3 [shape = 's32[1]{0}', space=sflag, size = 0x4, scoped, tag = 'scoped memory for tpu_custom_call.1']
    %10 = vsyncpa [#allocation3], 0
    // Predicated region
    $region2: #{tpu_custom_call.1} parent=1 // pred_check
      _
    $region3: #{tpu_custom_call.1} parent=1 // pred_check_branch
      %12 = sbr.rel (0) target = $region5
    $region4: #{tpu_custom_call.1} parent=1 // pred_region
      _
    $region5: #{tpu_custom_call.1} parent=1 // pred_fallthru
      _
    // Predicated region
    $region6: #{tpu_custom_call.1} parent=1 // pred_check
      _
    $region7: #{tpu_custom_call.1} parent=1 // pred_check_branch
      %14 = sbr.rel (0) target = $region9
    $region8: #{tpu_custom_call.1} parent=1 // pred_region
      _
    $region9: #{tpu_custom_call.1} parent=1 // pred_fallthru
      _
    // Predicated region
    $region10: #{tpu_custom_call.1} parent=1 // pred_check
      _
    $region11: #{tpu_custom_call.1} parent=1 // pred_check_branch
      %16 = sbr.rel (0) target = $region13
    $region12: #{tpu_custom_call.1} parent=1 // pred_region
      _
    $region13: #{tpu_custom_call.1} parent=1 // pred_fallthru
      _
    // Predicated region
    $region14: #{tpu_custom_call.1} parent=1 // pred_check
      _
    $region15: #{tpu_custom_call.1} parent=1 // pred_check_branch
      %18 = sbr.rel (0) target = $region17
    $region16: #{tpu_custom_call.1} parent=1 // pred_region
      _
    $region17: #{tpu_custom_call.1} parent=1 // pred_fallthru
      _
    // Predicated region
    $region18: #{tpu_custom_call.1} parent=1 // pred_check
      _
    $region19: #{tpu_custom_call.1} parent=1 // pred_check_branch
      %20 = sbr.rel (0) target = $region21
    $region20: #{tpu_custom_call.1} parent=1 // pred_region
      _
    $region21: #{tpu_custom_call.1} parent=1 // pred_fallthru
      _
    %v21 = vld [vmem:[%s0] sm:$0xf]
    %v22 = vmul.f32 %v21, %v21
    %v23 = vmul.f32 %v22, %v21
    %v24 = vld [vmem:[%s1] sm:$0xff]
    %v25 = vld [vmem:[%s1 + $0x8] sm:$0xff]
    %v26 = vld [vmem:[%s1 + $0x10] sm:$0xff]
    %v27 = vld [vmem:[%s1 + $0x18] sm:$0xff]
    %v28 = vld [vmem:[%s1 + $0x20] sm:$0xff]
    %v29 = vld [vmem:[%s1 + $0x28] sm:$0xff]
    %v30 = vld [vmem:[%s1 + $0x30] sm:$0x3]
    %32 = vset.pattern.permute.xlu0 0
    %33 = vperm.xlu0 %32, %v24
    %v34 = vpop.permute.xlu0 %33
    %37 = vset.pattern.permute.xlu0 0
    %38 = vperm.xlu0 %37, %v25
    %v39 = vpop.permute.xlu0 %38
    %42 = vset.pattern.permute.xlu0 0
    %43 = vperm.xlu0 %42, %v26
    %v44 = vpop.permute.xlu0 %43
    %47 = vset.pattern.permute.xlu0 0
    %48 = vperm.xlu0 %47, %v27
    %v49 = vpop.permute.xlu0 %48
    %52 = vset.pattern.permute.xlu0 0
    %53 = vperm.xlu0 %52, %v28
    %v54 = vpop.permute.xlu0 %53
    %57 = vset.pattern.permute.xlu0 0
    %58 = vperm.xlu0 %57, %v29
    %v59 = vpop.permute.xlu0 %58
    %62 = vset.pattern.permute.xlu0 0
    %63 = vperm.xlu0 %62, %v30
    %v64 = vpop.permute.xlu0 %63
    %v67 = vperm.slane %v23, 0
    %v68 = vperm.slane %v23, 2
    %v71 = vperm.slane %v67, 0
    %v72 = vperm.slane %v68, 0
    %v73 = vmul.f32 %v34, %v71
    %v74 = vmul.f32 %v34, %v72
    %v75 = vmul.f32 %v39, %v71
    %v76 = vmul.f32 %v39, %v72
    %v77 = vmul.f32 %v44, %v71
    %v78 = vmul.f32 %v44, %v72
    %v79 = vmul.f32 %v49, %v71
    %v80 = vmul.f32 %v49, %v72
    %v81 = vmul.f32 %v54, %v71
    %v82 = vmul.f32 %v54, %v72
    %v83 = vmul.f32 %v59, %v71
    %v84 = vmul.f32 %v59, %v72
    %v85 = vmul.f32 %v64, %v71
    %v86 = vmul.f32 %v64, %v72
    %87 = vset.pattern.permute.xlu0 1
    %88 = vperm.xlu0 %87, %v24
    %v89 = vpop.permute.xlu0 %88
    %91 = vset.pattern.permute.xlu0 1
    %92 = vperm.xlu0 %91, %v25
    %v93 = vpop.permute.xlu0 %92
    %95 = vset.pattern.permute.xlu0 1
    %96 = vperm.xlu0 %95, %v26
    %v97 = vpop.permute.xlu0 %96
    %99 = vset.pattern.permute.xlu0 1
    %100 = vperm.xlu0 %99, %v27
    %v101 = vpop.permute.xlu0 %100
    %103 = vset.pattern.permute.xlu0 1
    %104 = vperm.xlu0 %103, %v28
    %v105 = vpop.permute.xlu0 %104
    %107 = vset.pattern.permute.xlu0 1
    %108 = vperm.xlu0 %107, %v29
    %v109 = vpop.permute.xlu0 %108
    %111 = vset.pattern.permute.xlu0 1
    %112 = vperm.xlu0 %111, %v30
    %v113 = vpop.permute.xlu0 %112
    %v115 = vperm.slane %v23, 1
    %v116 = vperm.slane %v23, 3
    %v119 = vperm.slane %v115, 1
    %v120 = vperm.slane %v116, 1
    %v121 = vmul.f32 %v89, %v119
    %v122 = vmul.f32 %v89, %v120
    %v123 = vmul.f32 %v93, %v119
    %v124 = vmul.f32 %v93, %v120
    %v125 = vmul.f32 %v97, %v119
    %v126 = vmul.f32 %v97, %v120
    %v127 = vmul.f32 %v101, %v119
    %v128 = vmul.f32 %v101, %v120
    %v129 = vmul.f32 %v105, %v119
    %v130 = vmul.f32 %v105, %v120
    %v131 = vmul.f32 %v109, %v119
    %v132 = vmul.f32 %v109, %v120
    %v133 = vmul.f32 %v113, %v119
    %v134 = vmul.f32 %v113, %v120
    %v135 = vadd.f32 %v73, %v121
    %v136 = vadd.f32 %v74, %v122
    %v137 = vadd.f32 %v75, %v123
    %v138 = vadd.f32 %v76, %v124
    %v139 = vadd.f32 %v77, %v125
    %v140 = vadd.f32 %v78, %v126
    %v141 = vadd.f32 %v79, %v127
    %v142 = vadd.f32 %v80, %v128
    %v143 = vadd.f32 %v81, %v129
    %v144 = vadd.f32 %v82, %v130
    %v145 = vadd.f32 %v83, %v131
    %v146 = vadd.f32 %v84, %v132
    %v147 = vadd.f32 %v85, %v133
    %v148 = vadd.f32 %v86, %v134
    %v149 = vld [vmem:[%s2] sm:$0xff]
    %v150 = vld [vmem:[%s2 + $0x8] sm:$0xff]
    %v151 = vld [vmem:[%s2 + $0x10] sm:$0xff]
    %v152 = vld [vmem:[%s2 + $0x18] sm:$0xff]
    %v153 = vld [vmem:[%s2 + $0x20] sm:$0xff]
    %v154 = vld [vmem:[%s2 + $0x28] sm:$0xff]
    %v155 = vld [vmem:[%s2 + $0x30] sm:$0x3]
    %157 = vset.pattern.permute.xlu0 0
    %158 = vperm.xlu0 %157, %v149
    %v159 = vpop.permute.xlu0 %158
    %162 = vset.pattern.permute.xlu0 0
    %163 = vperm.xlu0 %162, %v150
    %v164 = vpop.permute.xlu0 %163
    %167 = vset.pattern.permute.xlu0 0
    %168 = vperm.xlu0 %167, %v151
    %v169 = vpop.permute.xlu0 %168
    %172 = vset.pattern.permute.xlu0 0
    %173 = vperm.xlu0 %172, %v152
    %v174 = vpop.permute.xlu0 %173
    %177 = vset.pattern.permute.xlu0 0
    %178 = vperm.xlu0 %177, %v153
    %v179 = vpop.permute.xlu0 %178
    %182 = vset.pattern.permute.xlu0 0
    %183 = vperm.xlu0 %182, %v154
    %v184 = vpop.permute.xlu0 %183
    %187 = vset.pattern.permute.xlu0 0
    %188 = vperm.xlu0 %187, %v155
    %v189 = vpop.permute.xlu0 %188
    %v191 = vadd.f32 %v135, %v159
    %v192 = vadd.f32 %v136, %v159
    %v193 = vadd.f32 %v137, %v164
    %v194 = vadd.f32 %v138, %v164
    %v195 = vadd.f32 %v139, %v169
    %v196 = vadd.f32 %v140, %v169
    %v197 = vadd.f32 %v141, %v174
    %v198 = vadd.f32 %v142, %v174
    %v199 = vadd.f32 %v143, %v179
    %v200 = vadd.f32 %v144, %v179
    %v201 = vadd.f32 %v145, %v184
    %v202 = vadd.f32 %v146, %v184
    %v203 = vadd.f32 %v147, %v189
    %v204 = vadd.f32 %v148, %v189
    %v205 = vtanh.pop %v191
    %v206 = vtanh.pop %v192
    %v207 = vtanh.pop %v193
    %v208 = vtanh.pop %v194
    %v209 = vtanh.pop %v195
    %v210 = vtanh.pop %v196
    %v211 = vtanh.pop %v197
    %v212 = vtanh.pop %v198
    %v213 = vtanh.pop %v199
    %v214 = vtanh.pop %v200
    %v215 = vtanh.pop %v201
    %v216 = vtanh.pop %v202
    %v217 = vtanh.pop %v203
    %v218 = vtanh.pop %v204
    %v219 = vld [vmem:[%s3] sm:$0x3]
    %v220 = vld [vmem:[%s4] sm:$0x3]
    %222 = vset.pattern.permute.xlu0 0
    %223 = vperm.xlu0 %222, %v220
    %v224 = vpop.permute.xlu0 %223
    %vm226 = vcmask 408576
    %v228 = vsel %vm226, %v219, 0
    %vm230 = vcmask 1041408
    %v232 = vsel %vm230, %v217, 0
    %v235 = vsel %vm230, %v218, 0
    %237 = vmatpush.msra.mxu0 0.0
    %238 = vmatpush.msra.mxu0 0.0
    %239 = vmatpush.msra.mxu0 0.0
    %240 = vmatpush.msra.mxu0 0.0
    %241 = vmatpush.msra.mxu0 0.0
    %242 = vmatpush.msra.mxu0 0.0
    %243 = vmatpush.msra.mxu0 0.0
    %244 = vmatpush.msra.mxu0 0.0
    %245 = vmatpush.msra.mxu0 0.0
    %246 = vmatpush.msra.mxu0 %v232
    %247 = vmatpush.msra.mxu0 %v215
    %248 = vmatpush.msra.mxu0 %v213
    %249 = vmatpush.msra.mxu0 %v211
    %250 = vmatpush.msra.mxu0 %v209
    %251 = vmatpush.msra.mxu0 %v207
    %252 = vmatpush.msra.mxu0 %v205
    %253 = vmatmul.f32.gmra.mxu0 %v228
    %v254 = vpop.f32.mrf.mxu0
    %v255 = vadd.f32 %v224, %v254
    %256 = vdwg.mxu0
    %257 = vmatpush.msra.mxu0 0.0
    %258 = vmatpush.msra.mxu0 0.0
    %259 = vmatpush.msra.mxu0 0.0
    %260 = vmatpush.msra.mxu0 0.0
    %261 = vmatpush.msra.mxu0 0.0
    %262 = vmatpush.msra.mxu0 0.0
    %263 = vmatpush.msra.mxu0 0.0
    %264 = vmatpush.msra.mxu0 0.0
    %265 = vmatpush.msra.mxu0 0.0
    %266 = vmatpush.msra.mxu0 %v235
    %267 = vmatpush.msra.mxu0 %v216
    %268 = vmatpush.msra.mxu0 %v214
    %269 = vmatpush.msra.mxu0 %v212
    %270 = vmatpush.msra.mxu0 %v210
    %271 = vmatpush.msra.mxu0 %v208
    %272 = vmatpush.msra.mxu0 %v206
    %273 = vmatmul.f32.gmra.mxu0 %v228
    %v274 = vpop.f32.mrf.mxu0
    %v275 = vadd.f32 %v224, %v274
    %276 = vdwg.mxu0
    %v279 = vrot.slane %v275, 6
    %v280 = vsel %vm230, %v255, %v279
    %282 = vst [vmem:[#allocation2] sm:$0xf] %v280
    // Predicated region
    $region22: #{tpu_custom_call.1} parent=1 // pred_check
      _
    $region23: #{tpu_custom_call.1} parent=1 // pred_check_branch
      %284 = sbr.rel (0) target = $region25
    $region24: #{tpu_custom_call.1} parent=1 // pred_region
      %286 = vsyncadd [#allocation3], 0
      %s288 = sshll.u32 [#allocation2], 4
      %s289 = int_to_ptr.vmem [resolvable:$true] %s288
      %s290 = sshll.u32 %s5, 4
      %s291 = int_to_ptr.hbm [resolvable:$true] %s290
      %293 = dma.vmem_to_hbm [thread:$0]  %s289, 64, %s291, [#allocation3]
    $region25: #{tpu_custom_call.1} parent=1 // pred_fallthru
      _
    // Predicated region
    $region26: #{tpu_custom_call.1} parent=1 // pred_check
      _
    $region27: #{tpu_custom_call.1} parent=1 // pred_check_branch
      %295 = sbr.rel (0) target = $region29
    $region28: #{tpu_custom_call.1} parent=1 // pred_region
      %297 = dma.done [#allocation3], 64
    $region29: #{tpu_custom_call.1} parent=1 // pred_fallthru
      _
    %298 = vsyncpa [#allocation3], 1

</llo_original>
